<compile_context>
chip_gen: v7x
topology: tpu7x:2x2x1
jax: 0.10.0
libtpu: 0.0.40
codegen_flags: <defaults>
</compile_context>

<pallas_src>
import functools

import jax
import jax.numpy as jnp
from jax.experimental import pallas as pl
from jax.experimental.pallas import tpu as pltpu

HIDDEN = 128   # matches `hidden_size = 128` in the reference script
VOCAB = 32     # small synthetic input_size (vocab)


def gru_encoder_kernel(tok_ref,            # SMEM (T,) int32 (scalar-prefetch; used in index_map)
                       emb_ref,            # VMEM (1, 1, H) bf16   -- the gathered embedding row
                       h0_ref,             # VMEM (1, H)    f32    -- initial hidden
                       wih_ref, whh_ref,   # VMEM (H, 3H)   bf16   -- pre-transposed weights
                       bih_ref, bhh_ref,   # VMEM (1, 3H)   f32
                       out_ref,            # VMEM (1, 1, H) f32    -- hidden after this step
                       h_scratch):         # VMEM (1, H)    f32    -- hidden carry across steps
    del tok_ref  # only consumed by the BlockSpec index_map
    H = HIDDEN
    t = pl.program_id(0)

    @pl.when(t == 0)
    def _():
        h_scratch[...] = h0_ref[...]

    x = emb_ref[0]                 # (1, H) bf16
    h = h_scratch[...]             # (1, H) f32

    # GRU gate pre-activations (PyTorch gate order: r, z, n). bf16 MXU, f32 accumulation.
    gi = jnp.dot(x, wih_ref[...], preferred_element_type=jnp.float32) + bih_ref[...]
    gh = jnp.dot(h.astype(jnp.bfloat16), whh_ref[...],
                 preferred_element_type=jnp.float32) + bhh_ref[...]

    i_r, i_z, i_n = gi[:, 0:H], gi[:, H:2 * H], gi[:, 2 * H:3 * H]
    h_r, h_z, h_n = gh[:, 0:H], gh[:, H:2 * H], gh[:, 2 * H:3 * H]

    # Elementwise gate math stays in f32 (v5e has no bf16 VPU/EUP).
    r = jax.nn.sigmoid(i_r + h_r)
    z = jax.nn.sigmoid(i_z + h_z)
    n = jnp.tanh(i_n + r * h_n)
    h_new = (1.0 - z) * n + z * h

    h_scratch[...] = h_new
    out_ref[0] = h_new.astype(out_ref.dtype)


def prepare_params(emb, w_ih, w_hh, b_ih, b_hh):
    """One-time parameter prep (transposes / reshapes / bf16 cast), outside the hot path."""
    V, H = emb.shape
    return {
        "emb":    emb.astype(jnp.bfloat16).reshape(V, 1, H),   # (V, 1, H) bf16, stays in HBM
        "w_ih_t": w_ih.T.astype(jnp.bfloat16),                 # (H, 3H)
        "w_hh_t": w_hh.T.astype(jnp.bfloat16),                 # (H, 3H)
        "b_ih":   b_ih.reshape(1, 3 * H).astype(jnp.float32),
        "b_hh":   b_hh.reshape(1, 3 * H).astype(jnp.float32),
    }


@jax.jit
def gru_encode(tokens, h0, params):
    """Run the GRU encoder over a token sequence.

    tokens: (T,) int; h0: (1, H) f32.  Returns (T, 1, H) f32: hidden state after each step.
    """
    T = tokens.shape[0]
    V = params["emb"].shape[0]
    H = HIDDEN
    tokens = jnp.clip(tokens.astype(jnp.int32), 0, V - 1)   # guard against OOB embedding reads

    outs = pl.pallas_call(
        gru_encoder_kernel,
        out_shape=jax.ShapeDtypeStruct((T, 1, H), jnp.float32),
        grid_spec=pltpu.PrefetchScalarGridSpec(
            num_scalar_prefetch=1,
            grid=(T,),
            in_specs=[
                # Gather exactly one embedding row per step (data-dependent index_map).
                pl.BlockSpec((1, 1, H), lambda t, tok: (tok[t], 0, 0)),
                # Initial hidden + weights + biases: constant block -> VMEM-resident.
                pl.BlockSpec((1, H),        lambda t, tok: (0, 0)),
                pl.BlockSpec((H, 3 * H),    lambda t, tok: (0, 0)),
                pl.BlockSpec((H, 3 * H),    lambda t, tok: (0, 0)),
                pl.BlockSpec((1, 3 * H),    lambda t, tok: (0, 0)),
                pl.BlockSpec((1, 3 * H),    lambda t, tok: (0, 0)),
            ],
            out_specs=pl.BlockSpec((1, 1, H), lambda t, tok: (t, 0, 0)),
            scratch_shapes=[pltpu.VMEM((1, H), jnp.float32)],
        ),
        compiler_params=pltpu.CompilerParams(
            dimension_semantics=("arbitrary",),   # hidden state carries across steps
        ),
    )(tokens, params["emb"], h0,
      params["w_ih_t"], params["w_hh_t"], params["b_ih"], params["b_hh"])
    return outs


def encoder_forward(token_id, hidden, params):
    """Matches Encoder.forward: token_id (1,) int, hidden (1,1,H) -> (output, hidden), (1,1,H)."""
    h0 = hidden.reshape(1, HIDDEN)
    seq = gru_encode(token_id, h0, params)          # (1, 1, H)
    out = seq.reshape(1, 1, HIDDEN)
    return out, out                                  # single GRU step: output == new hidden


def _reference(tokens, h0, params):
    """Pure-JAX reference with identical (bf16-rounded) parameters."""
    H = HIDDEN
    emb = params["emb"].astype(jnp.float32)          # (V, 1, H)
    wih = params["w_ih_t"].astype(jnp.float32)       # (H, 3H)
    whh = params["w_hh_t"].astype(jnp.float32)
    b_ih, b_hh = params["b_ih"], params["b_hh"]
    h = h0
    outs = []
    for t in range(tokens.shape[0]):
        x = emb[tokens[t]].reshape(1, H)
        gi = x @ wih + b_ih
        gh = h.astype(jnp.bfloat16).astype(jnp.float32) @ whh + b_hh
        r = jax.nn.sigmoid(gi[:, 0:H] + gh[:, 0:H])
        z = jax.nn.sigmoid(gi[:, H:2 * H] + gh[:, H:2 * H])
        n = jnp.tanh(gi[:, 2 * H:] + r * gh[:, 2 * H:])
        h = (1.0 - z) * n + z * h
        outs.append(h)
    return jnp.stack(outs, axis=0)                    # (T, 1, H)


if __name__ == "__main__":
    key = jax.random.PRNGKey(0)
    k_emb, k_wih, k_whh, k_bih, k_bhh, k_h, k_tok = jax.random.split(key, 7)

    # Deterministic synthetic parameters (same shapes torch would allocate).
    scale = 1.0 / jnp.sqrt(HIDDEN)
    emb = jax.random.normal(k_emb, (VOCAB, HIDDEN), jnp.float32)
    w_ih = jax.random.uniform(k_wih, (3 * HIDDEN, HIDDEN), jnp.float32, -scale, scale)
    w_hh = jax.random.uniform(k_whh, (3 * HIDDEN, HIDDEN), jnp.float32, -scale, scale)
    b_ih = jax.random.uniform(k_bih, (3 * HIDDEN,), jnp.float32, -scale, scale)
    b_hh = jax.random.uniform(k_bhh, (3 * HIDDEN,), jnp.float32, -scale, scale)

    params = prepare_params(emb, w_ih, w_hh, b_ih, b_hh)

    # --- Test 1: single-step forward (exact module semantics) ---
    token_id = jnp.array([7], dtype=jnp.int32)
    hidden0 = jax.random.normal(k_h, (1, 1, HIDDEN), jnp.float32)

    output, hidden1 = encoder_forward(token_id, hidden0, params)
    jax.block_until_ready((output, hidden1))

    ref1 = _reference(token_id, hidden0.reshape(1, HIDDEN), params).reshape(1, 1, HIDDEN)
    assert output.shape == (1, 1, HIDDEN) and hidden1.shape == (1, 1, HIDDEN)
    assert jnp.allclose(output, ref1, atol=1e-3), "single-step output mismatch vs reference"
    assert jnp.allclose(hidden1, ref1, atol=1e-3), "single-step hidden mismatch vs reference"

    # --- Test 2: multi-token encode (hidden carried in VMEM scratch across the grid) ---
    T = 6
    tokens = jax.random.randint(k_tok, (T,), 0, VOCAB, dtype=jnp.int32)
    seq_out = gru_encode(tokens, hidden0.reshape(1, HIDDEN), params)
    jax.block_until_ready(seq_out)

    ref_seq = _reference(tokens, hidden0.reshape(1, HIDDEN), params)
    assert seq_out.shape == (T, 1, HIDDEN)
    assert jnp.allclose(seq_out, ref_seq, atol=1e-3), "sequence encode mismatch vs reference"

    print("KERNEL_OK")
</pallas_src>

<mosaic_0001>
module attributes {stable_mosaic.version = 11 : i64} {
  func.func @gru_encoder_kernel(%arg0: i32, %arg1: memref<1xi32, #tpu.memory_space<smem>>, %arg2: memref<1x1x128xbf16, #tpu.memory_space<vmem>>, %arg3: memref<1x128xf32, #tpu.memory_space<vmem>>, %arg4: memref<128x384xbf16, #tpu.memory_space<vmem>>, %arg5: memref<128x384xbf16, #tpu.memory_space<vmem>>, %arg6: memref<1x384xf32, #tpu.memory_space<vmem>>, %arg7: memref<1x384xf32, #tpu.memory_space<vmem>>, %arg8: memref<1x1x128xf32, #tpu.memory_space<vmem>>, %arg9: memref<1x128xf32, #tpu.memory_space<vmem>>) attributes {dimension_semantics = [#tpu.dimension_semantics<arbitrary>], iteration_bounds = array<i64: 1>, scalar_prefetch = 1 : i64, scratch_operands = 1 : i64, tpu.core_type = #tpu.core_type<tc>, window_params = [{transform_indices = @transform_0, window_bounds = array<i64: 1, 1, 128>}, {pipeline_mode = #tpu.pipeline_mode<synchronous>, transform_indices = @transform_1, window_bounds = array<i64: 1, 128>}, {pipeline_mode = #tpu.pipeline_mode<synchronous>, transform_indices = @transform_2, window_bounds = array<i64: 128, 384>}, {pipeline_mode = #tpu.pipeline_mode<synchronous>, transform_indices = @transform_3, window_bounds = array<i64: 128, 384>}, {pipeline_mode = #tpu.pipeline_mode<synchronous>, transform_indices = @transform_4, window_bounds = array<i64: 1, 384>}, {pipeline_mode = #tpu.pipeline_mode<synchronous>, transform_indices = @transform_5, window_bounds = array<i64: 1, 384>}, {transform_indices = @transform_6, window_bounds = array<i64: 1, 1, 128>}]} {
    %c0_i32 = arith.constant 0 : i32
    %0 = arith.cmpi eq, %arg0, %c0_i32 : i32
    %1 = arith.extui %0 : i1 to i32
    %c0_i32_0 = arith.constant 0 : i32
    %2 = arith.cmpi ne, %1, %c0_i32_0 : i32
    scf.if %2 {
      %c0_22 = arith.constant 0 : index
      %c0_23 = arith.constant 0 : index
      %45 = vector.load %arg3[%c0_22, %c0_23] : memref<1x128xf32, #tpu.memory_space<vmem>>, vector<1x128xf32>
      %c0_24 = arith.constant 0 : index
      %c0_25 = arith.constant 0 : index
      %46 = vector.load %arg9[%c0_24, %c0_25] : memref<1x128xf32, #tpu.memory_space<vmem>>, vector<1x128xf32>
      tpu.vector_store %arg9[%c0_24, %c0_25], %45 {strides = array<i32>} : memref<1x128xf32, #tpu.memory_space<vmem>>, vector<1x128xf32>,
    } else {
    }
    %c0 = arith.constant 0 : index
    %c0_1 = arith.constant 0 : index
    %c0_2 = arith.constant 0 : index
    %3 = vector.load %arg2[%c0, %c0_1, %c0_2] : memref<1x1x128xbf16, #tpu.memory_space<vmem>>, vector<1x1x128xbf16>
    %4 = vector.shape_cast %3 : vector<1x1x128xbf16> to vector<1x128xbf16>
    %c0_3 = arith.constant 0 : index
    %c0_4 = arith.constant 0 : index
    %5 = vector.load %arg9[%c0_3, %c0_4] : memref<1x128xf32, #tpu.memory_space<vmem>>, vector<1x128xf32>
    %c0_5 = arith.constant 0 : index
    %c0_6 = arith.constant 0 : index
    %6 = vector.load %arg4[%c0_5, %c0_6] : memref<128x384xbf16, #tpu.memory_space<vmem>>, vector<128x384xbf16>
    %cst = arith.constant dense<0.000000e+00> : vector<1x384xf32>
    %7 = tpu.matmul %4, %6, %cst {dimension_numbers = #tpu.dot_dimension_numbers<[1], [0], [0], [1], [0, 0, 1, 1], [], []>} : vector<1x128xbf16>, vector<128x384xbf16>, vector<1x384xf32> -> vector<1x384xf32>
    %c0_7 = arith.constant 0 : index
    %c0_8 = arith.constant 0 : index
    %8 = vector.load %arg6[%c0_7, %c0_8] : memref<1x384xf32, #tpu.memory_space<vmem>>, vector<1x384xf32>
    %9 = arith.addf %7, %8 : vector<1x384xf32>
    %10 = arith.truncf %5 : vector<1x128xf32> to vector<1x128xbf16>
    %c0_9 = arith.constant 0 : index
    %c0_10 = arith.constant 0 : index
    %11 = vector.load %arg5[%c0_9, %c0_10] : memref<128x384xbf16, #tpu.memory_space<vmem>>, vector<128x384xbf16>
    %cst_11 = arith.constant dense<0.000000e+00> : vector<1x384xf32>
    %12 = tpu.matmul %10, %11, %cst_11 {dimension_numbers = #tpu.dot_dimension_numbers<[1], [0], [0], [1], [0, 0, 1, 1], [], []>} : vector<1x128xbf16>, vector<128x384xbf16>, vector<1x384xf32> -> vector<1x384xf32>
    %c0_12 = arith.constant 0 : index
    %c0_13 = arith.constant 0 : index
    %13 = vector.load %arg7[%c0_12, %c0_13] : memref<1x384xf32, #tpu.memory_space<vmem>>, vector<1x384xf32>
    %14 = arith.addf %12, %13 : vector<1x384xf32>
    %15 = vector.extract_strided_slice %9 {offsets = [0, 0], sizes = [1, 128], strides = [1, 1]} : vector<1x384xf32> to vector<1x128xf32>
    %16 = vector.extract_strided_slice %9 {offsets = [0, 128], sizes = [1, 128], strides = [1, 1]} : vector<1x384xf32> to vector<1x128xf32>
    %17 = vector.extract_strided_slice %9 {offsets = [0, 256], sizes = [1, 128], strides = [1, 1]} : vector<1x384xf32> to vector<1x128xf32>
    %18 = vector.extract_strided_slice %14 {offsets = [0, 0], sizes = [1, 128], strides = [1, 1]} : vector<1x384xf32> to vector<1x128xf32>
    %19 = vector.extract_strided_slice %14 {offsets = [0, 128], sizes = [1, 128], strides = [1, 1]} : vector<1x384xf32> to vector<1x128xf32>
    %20 = vector.extract_strided_slice %14 {offsets = [0, 256], sizes = [1, 128], strides = [1, 1]} : vector<1x384xf32> to vector<1x128xf32>
    %21 = arith.addf %15, %18 : vector<1x128xf32>
    %22 = arith.negf %21 : vector<1x128xf32>
    %23 = math.exp %22 : vector<1x128xf32>
    %cst_14 = arith.constant 1.000000e+00 : f32
    %24 = vector.broadcast %cst_14 : f32 to vector<1x128xf32>
    %25 = arith.addf %24, %23 : vector<1x128xf32>
    %26 = arith.divf %24, %25 : vector<1x128xf32>
    %27 = arith.addf %16, %19 : vector<1x128xf32>
    %28 = arith.negf %27 : vector<1x128xf32>
    %29 = math.exp %28 : vector<1x128xf32>
    %cst_15 = arith.constant 1.000000e+00 : f32
    %30 = vector.broadcast %cst_15 : f32 to vector<1x128xf32>
    %31 = arith.addf %30, %29 : vector<1x128xf32>
    %32 = arith.divf %30, %31 : vector<1x128xf32>
    %33 = arith.mulf %26, %20 : vector<1x128xf32>
    %34 = arith.addf %17, %33 : vector<1x128xf32>
    %35 = math.tanh %34 : vector<1x128xf32>
    %cst_16 = arith.constant 1.000000e+00 : f32
    %36 = vector.broadcast %cst_16 : f32 to vector<1x128xf32>
    %37 = arith.subf %36, %32 : vector<1x128xf32>
    %38 = arith.mulf %37, %35 : vector<1x128xf32>
    %39 = arith.mulf %32, %5 : vector<1x128xf32>
    %40 = arith.addf %38, %39 : vector<1x128xf32>
    %c0_17 = arith.constant 0 : index
    %c0_18 = arith.constant 0 : index
    %41 = vector.load %arg9[%c0_17, %c0_18] : memref<1x128xf32, #tpu.memory_space<vmem>>, vector<1x128xf32>
    tpu.vector_store %arg9[%c0_17, %c0_18], %40 {strides = array<i32>} : memref<1x128xf32, #tpu.memory_space<vmem>>, vector<1x128xf32>,
    %c0_19 = arith.constant 0 : index
    %c0_20 = arith.constant 0 : index
    %c0_21 = arith.constant 0 : index
    %42 = vector.load %arg8[%c0_19, %c0_20, %c0_21] : memref<1x1x128xf32, #tpu.memory_space<vmem>>, vector<1x1x128xf32>
    %43 = vector.shape_cast %42 : vector<1x1x128xf32> to vector<1x128xf32>
    %44 = vector.shape_cast %40 : vector<1x128xf32> to vector<1x1x128xf32>
    tpu.vector_store %arg8[%c0_19, %c0_20, %c0_21], %44 {strides = array<i32>} : memref<1x1x128xf32, #tpu.memory_space<vmem>>, vector<1x1x128xf32>,
    return
  }
  func.func @transform_0(%arg0: i32, %arg1: memref<1xi32, #tpu.memory_space<smem>>) -> (i32, i32, i32) {
    %0 = arith.index_cast %arg0 : i32 to index
    %1 = memref.load %arg1[%0] : memref<1xi32, #tpu.memory_space<smem>>
    %c0_i32 = arith.constant 0 : i32
    %c0_i32_0 = arith.constant 0 : i32
    %c0_i32_1 = arith.constant 0 : i32
    return %1, %c0_i32, %c0_i32_0 : i32, i32, i32
  }
  func.func @transform_1(%arg0: i32, %arg1: memref<1xi32, #tpu.memory_space<smem>>) -> (i32, i32) {
    %c0_i32 = arith.constant 0 : i32
    %c0_i32_0 = arith.constant 0 : i32
    %c0_i32_1 = arith.constant 0 : i32
    return %c0_i32, %c0_i32_0 : i32, i32
  }
  func.func @transform_2(%arg0: i32, %arg1: memref<1xi32, #tpu.memory_space<smem>>) -> (i32, i32) {
    %c0_i32 = arith.constant 0 : i32
    %c0_i32_0 = arith.constant 0 : i32
    %c0_i32_1 = arith.constant 0 : i32
    return %c0_i32, %c0_i32_0 : i32, i32
  }
  func.func @transform_3(%arg0: i32, %arg1: memref<1xi32, #tpu.memory_space<smem>>) -> (i32, i32) {
    %c0_i32 = arith.constant 0 : i32
    %c0_i32_0 = arith.constant 0 : i32
    %c0_i32_1 = arith.constant 0 : i32
    return %c0_i32, %c0_i32_0 : i32, i32
  }
  func.func @transform_4(%arg0: i32, %arg1: memref<1xi32, #tpu.memory_space<smem>>) -> (i32, i32) {
    %c0_i32 = arith.constant 0 : i32
    %c0_i32_0 = arith.constant 0 : i32
    %c0_i32_1 = arith.constant 0 : i32
    return %c0_i32, %c0_i32_0 : i32, i32
  }
  func.func @transform_5(%arg0: i32, %arg1: memref<1xi32, #tpu.memory_space<smem>>) -> (i32, i32) {
    %c0_i32 = arith.constant 0 : i32
    %c0_i32_0 = arith.constant 0 : i32
    %c0_i32_1 = arith.constant 0 : i32
    return %c0_i32, %c0_i32_0 : i32, i32
  }
  func.func @transform_6(%arg0: i32, %arg1: memref<1xi32, #tpu.memory_space<smem>>) -> (i32, i32, i32) {
    %c0_i32 = arith.constant 0 : i32
    %c0_i32_0 = arith.constant 0 : i32
    %c0_i32_1 = arith.constant 0 : i32
    return %arg0, %c0_i32, %c0_i32_0 : i32, i32, i32
  }
}

</mosaic_0001>

<llo_original>
// kernel: gru_encode.1
$region0: #{gru_encode.1}
  #allocation0 [shape = 'u32[]', space=smem, size = 0x4, offset = 0x4, fixed_abs, tag = 'smem constant byte address 0x4 - core index']
  #allocation1 [shape = 'u32[144,128]{1,0:T(1,128)}', space=vmem, size = 0x12000, scoped, tag = 'internal scratch']
  #allocation2 [shape = 'f32[1,128]{1,0:T(1,128)}', space=vmem, size = 0x200, scoped, tag = 'scratch operand']
  #allocation3 [shape = 's32[1]{0}', space=sflag, size = 0x4, scoped, tag = 'scoped memory for gru_encode.1']
  #allocation4 [shape = 's32[1]{0:T(128)S(6)}', space=smem, size = 0x200, scoped, tag = 'prefetched SMEM operand 0']
  %s0 = inlined_call_operand.<no memory space> [shape: s32[1], index: 0, kind: input, shape index: {}]
  %s1 = inlined_call_operand.vmem [shape: bf16[32,1,128], index: 1, kind: input, shape index: {}]
  %s2 = inlined_call_operand.vmem [shape: f32[1,128], index: 2, kind: input, shape index: {}]
  %s3 = inlined_call_operand.hbm [shape: bf16[128,384], index: 3, kind: input, shape index: {}]
  %s4 = inlined_call_operand.hbm [shape: bf16[128,384], index: 4, kind: input, shape index: {}]
  %s5 = inlined_call_operand.vmem [shape: f32[1,384], index: 5, kind: input, shape index: {}]
  %s6 = inlined_call_operand.vmem [shape: f32[1,384], index: 6, kind: input, shape index: {}]
  %s7 = inlined_call_operand.hbm [shape: f32[1,1,128], index: 7, kind: output, shape index: {}]
  %s8 = sld [smem:[#allocation0]]
  $region46: #{gru_encode.1} parent=0
    _
  %s10 = ssub.s32 1, %s8
  %s11 = scalar_select 0, %s10, %s8
  %12 = sst [smem:[#allocation4]] %s0
  $region1: #{gru_encode.1} parent=0
    #allocation5 [shape = 'u8[98304]{0}', space=vmem, size = 0x18000, scoped, tag = 'input window, operand 3, single buffered']
    #allocation6 [shape = 's32[1]{0}', space=sflag, size = 0x4, scoped, tag = 'scoped memory for gru_encode.1']
    #allocation7 [shape = 's32[1]{0}', space=sflag, size = 0x4, scoped, tag = 'scoped memory for gru_encode.1']
    #allocation8 [shape = 'u8[98304]{0}', space=vmem, size = 0x18000, scoped, tag = 'input window, operand 4, single buffered']
    #allocation9 [shape = 's32[1]{0}', space=sflag, size = 0x4, scoped, tag = 'scoped memory for gru_encode.1']
    #allocation10 [shape = 'u8[512]{0}', space=vmem, size = 0x400, scoped, tag = 'output window, operand 0, single buffered']
    %13 = vsyncpa [#allocation6], 0
    %14 = vsyncpa [#allocation9], 0
    %15 = vsyncpa [#allocation7], 0
    // Predicated region
    $region2: #{gru_encode.1} parent=1 // pred_check
      _
    $region3: #{gru_encode.1} parent=1 // pred_check_branch
      %17 = sbr.rel (0) target = $region5
    $region4: #{gru_encode.1} parent=1 // pred_region
      %s18 = sld [smem:[#allocation4]]
      %p19 = scmp.lt.s32.totalorder %s18, 31
      %s20 = scalar_select %p19, %s18, 31
      %s21 = scalar_lea.vmem %s1, %s20
      %s22 = sld [smem:[#allocation4]]
    $region5: #{gru_encode.1} parent=1 // pred_fallthru
      _
    // Predicated region
    $region6: #{gru_encode.1} parent=1 // pred_check
      _
    $region7: #{gru_encode.1} parent=1 // pred_check_branch
      %24 = sbr.rel (0) target = $region9
    $region8: #{gru_encode.1} parent=1 // pred_region
      _
    $region9: #{gru_encode.1} parent=1 // pred_fallthru
      _
    // Predicated region
    $region10: #{gru_encode.1} parent=1 // pred_check
      _
    $region11: #{gru_encode.1} parent=1 // pred_check_branch
      %26 = sbr.rel (0) target = $region13
    $region12: #{gru_encode.1} parent=1 // pred_region
      %s28 = ssub.s32 3072, 3072
      %29 = vsyncadd [#allocation6], %s28
      %s30 = sshll.u32 [#allocation5], 4
      %s31 = int_to_ptr.vmem [resolvable:$true] %s30
      %36 = dma.hbm_to_vmem [thread:$0]  %s3, 3072, %s31, [#allocation6], 192, 192, 12
    $region13: #{gru_encode.1} parent=1 // pred_fallthru
      _
    // Predicated region
    $region14: #{gru_encode.1} parent=1 // pred_check
      _
    $region15: #{gru_encode.1} parent=1 // pred_check_branch
      %38 = sbr.rel (0) target = $region17
    $region16: #{gru_encode.1} parent=1 // pred_region
      %s40 = ssub.s32 3072, 3072
      %41 = vsyncadd [#allocation9], %s40
      %s42 = sshll.u32 [#allocation8], 4
      %s43 = int_to_ptr.vmem [resolvable:$true] %s42
      %48 = dma.hbm_to_vmem [thread:$0]  %s4, 3072, %s43, [#allocation9], 192, 192, 12
    $region17: #{gru_encode.1} parent=1 // pred_fallthru
      _
    // Predicated region
    $region18: #{gru_encode.1} parent=1 // pred_check
      _
    $region19: #{gru_encode.1} parent=1 // pred_check_branch
      %50 = sbr.rel (0) target = $region21
    $region20: #{gru_encode.1} parent=1 // pred_region
      _
    $region21: #{gru_encode.1} parent=1 // pred_fallthru
      _
    // Predicated region
    $region22: #{gru_encode.1} parent=1 // pred_check
      _
    $region23: #{gru_encode.1} parent=1 // pred_check_branch
      %52 = sbr.rel (0) target = $region25
    $region24: #{gru_encode.1} parent=1 // pred_region
      _
    $region25: #{gru_encode.1} parent=1 // pred_fallthru
      _
    // Predicated region
    $region26: #{gru_encode.1} parent=1 // pred_check
      _
    $region27: #{gru_encode.1} parent=1 // pred_check_branch
      %54 = sbr.rel (0) target = $region29
    $region28: #{gru_encode.1} parent=1 // pred_region
      %55 = dma.done [#allocation6], 3072
    $region29: #{gru_encode.1} parent=1 // pred_fallthru
      _
    // Predicated region
    $region30: #{gru_encode.1} parent=1 // pred_check
      _
    $region31: #{gru_encode.1} parent=1 // pred_check_branch
      %57 = sbr.rel (0) target = $region33
    $region32: #{gru_encode.1} parent=1 // pred_region
      %58 = dma.done [#allocation9], 3072
    $region33: #{gru_encode.1} parent=1 // pred_fallthru
      _
    %s59 = sld [smem:[#allocation4]]
    %p60 = scmp.lt.s32.totalorder %s59, 31
    %s61 = scalar_select %p60, %s59, 31
    %s62 = scalar_lea.vmem %s1, %s61
    %s63 = sld [smem:[#allocation4]]
    %p64 = scmp.lt.s32.totalorder %s63, 31
    %s65 = scalar_select %p64, %s63, 31
    %s66 = scalar_lea.vmem %s1, %s65
    %s67 = sld [smem:[#allocation4]]
    %p69 = scmp.eq.s32.totalorder 0, 0
    // Predicated region
    $region34: #{gru_encode.1} parent=1 // pred_check
      %p70 = pneg %p69
    $region35: #{gru_encode.1} parent=1 // pred_check_branch
      %72 = sbr.rel (%p70) target = $region37
    $region36: #{gru_encode.1} parent=1 // pred_region
      %v73 = vld [vmem:[%s2] sm:$0x1]
      %74 = vst [vmem:[#allocation2] sm:$0x1] %v73
    $region37: #{gru_encode.1} parent=1 // pred_fallthru
      _
    %v75 = vld [vmem:[%s66] sm:$0x1]
    %v76 = vld [vmem:[#allocation2] sm:$0x1]
    %v77 = vld [vmem:[#allocation5] sm:$0xff]
    %v78 = vld [vmem:[#allocation5 + $0x8] sm:$0xf]
    %v79 = vld [vmem:[#allocation5 + $0xc] sm:$0xff]
    %v80 = vld [vmem:[#allocation5 + $0x14] sm:$0xf]
    %v81 = vld [vmem:[#allocation5 + $0x18] sm:$0xff]
    %v82 = vld [vmem:[#allocation5 + $0x20] sm:$0xf]
    %v83 = vld [vmem:[#allocation5 + $0x24] sm:$0xff]
    %v84 = vld [vmem:[#allocation5 + $0x2c] sm:$0xf]
    %v85 = vld [vmem:[#allocation5 + $0x30] sm:$0xff]
    %v86 = vld [vmem:[#allocation5 + $0x38] sm:$0xf]
    %v87 = vld [vmem:[#allocation5 + $0x3c] sm:$0xff]
    %v88 = vld [vmem:[#allocation5 + $0x44] sm:$0xf]
    %v89 = vld [vmem:[#allocation5 + $0x48] sm:$0xff]
    %v90 = vld [vmem:[#allocation5 + $0x50] sm:$0xf]
    %v91 = vld [vmem:[#allocation5 + $0x54] sm:$0xff]
    %v92 = vld [vmem:[#allocation5 + $0x5c] sm:$0xf]
    %v93 = vld [vmem:[#allocation5 + $0x60] sm:$0xff]
    %v94 = vld [vmem:[#allocation5 + $0x68] sm:$0xf]
    %v95 = vld [vmem:[#allocation5 + $0x6c] sm:$0xff]
    %v96 = vld [vmem:[#allocation5 + $0x74] sm:$0xf]
    %v97 = vld [vmem:[#allocation5 + $0x78] sm:$0xff]
    %v98 = vld [vmem:[#allocation5 + $0x80] sm:$0xf]
    %v99 = vld [vmem:[#allocation5 + $0x84] sm:$0xff]
    %v100 = vld [vmem:[#allocation5 + $0x8c] sm:$0xf]
    %v101 = vld [vmem:[#allocation5 + $0x90] sm:$0xff]
    %v102 = vld [vmem:[#allocation5 + $0x98] sm:$0xf]
    %v103 = vld [vmem:[#allocation5 + $0x9c] sm:$0xff]
    %v104 = vld [vmem:[#allocation5 + $0xa4] sm:$0xf]
    %v105 = vld [vmem:[#allocation5 + $0xa8] sm:$0xff]
    %v106 = vld [vmem:[#allocation5 + $0xb0] sm:$0xf]
    %v107 = vld [vmem:[#allocation5 + $0xb4] sm:$0xff]
    %v108 = vld [vmem:[#allocation5 + $0xbc] sm:$0xf]
    %v109 = vld [vmem:[%s5] sm:$0x7]
    %v142 = vunpack.c.l.b16 %v77
    %v143 = vunpack.c.h.b16 %v77
    %v144 = vunpack.c.l.b16 %v78
    %v145 = vunpack.c.l.b16 %v79
    %v146 = vunpack.c.h.b16 %v79
    %v147 = vunpack.c.l.b16 %v80
    %v148 = vunpack.c.l.b16 %v81
    %v149 = vunpack.c.h.b16 %v81
    %v150 = vunpack.c.l.b16 %v82
    %v151 = vunpack.c.l.b16 %v83
    %v152 = vunpack.c.h.b16 %v83
    %v153 = vunpack.c.l.b16 %v84
    %v154 = vunpack.c.l.b16 %v85
    %v155 = vunpack.c.h.b16 %v85
    %v156 = vunpack.c.l.b16 %v86
    %v157 = vunpack.c.l.b16 %v87
    %v158 = vunpack.c.h.b16 %v87
    %v159 = vunpack.c.l.b16 %v88
    %v160 = vunpack.c.l.b16 %v89
    %v161 = vunpack.c.h.b16 %v89
    %v162 = vunpack.c.l.b16 %v90
    %v163 = vunpack.c.l.b16 %v91
    %v164 = vunpack.c.h.b16 %v91
    %v165 = vunpack.c.l.b16 %v92
    %v166 = vunpack.c.l.b16 %v93
    %v167 = vunpack.c.h.b16 %v93
    %v168 = vunpack.c.l.b16 %v94
    %v169 = vunpack.c.l.b16 %v95
    %v170 = vunpack.c.h.b16 %v95
    %v171 = vunpack.c.l.b16 %v96
    %v172 = vunpack.c.l.b16 %v97
    %v173 = vunpack.c.h.b16 %v97
    %v174 = vunpack.c.l.b16 %v98
    %v175 = vunpack.c.l.b16 %v99
    %v176 = vunpack.c.h.b16 %v99
    %v177 = vunpack.c.l.b16 %v100
    %v178 = vunpack.c.l.b16 %v101
    %v179 = vunpack.c.h.b16 %v101
    %v180 = vunpack.c.l.b16 %v102
    %v181 = vunpack.c.l.b16 %v103
    %v182 = vunpack.c.h.b16 %v103
    %v183 = vunpack.c.l.b16 %v104
    %v184 = vunpack.c.l.b16 %v105
    %v185 = vunpack.c.h.b16 %v105
    %v186 = vunpack.c.l.b16 %v106
    %v187 = vunpack.c.l.b16 %v107
    %v188 = vunpack.c.h.b16 %v107
    %v189 = vunpack.c.l.b16 %v108
    %v190 = vpack.c.b16 %v145, %v142
    %v191 = vpack.c.b16 %v146, %v143
    %v192 = vpack.c.b16 %v147, %v144
    %v193 = vpack.c.b16 %v151, %v148
    %v194 = vpack.c.b16 %v152, %v149
    %v195 = vpack.c.b16 %v153, %v150
    %v196 = vpack.c.b16 %v157, %v154
    %v197 = vpack.c.b16 %v158, %v155
    %v198 = vpack.c.b16 %v159, %v156
    %v199 = vpack.c.b16 %v163, %v160
    %v200 = vpack.c.b16 %v164, %v161
    %v201 = vpack.c.b16 %v165, %v162
    %v202 = vpack.c.b16 %v169, %v166
    %v203 = vpack.c.b16 %v170, %v167
    %v204 = vpack.c.b16 %v171, %v168
    %v205 = vpack.c.b16 %v175, %v172
    %v206 = vpack.c.b16 %v176, %v173
    %v207 = vpack.c.b16 %v177, %v174
    %v208 = vpack.c.b16 %v181, %v178
    %v209 = vpack.c.b16 %v182, %v179
    %v210 = vpack.c.b16 %v183, %v180
    %v211 = vpack.c.b16 %v187, %v184
    %v212 = vpack.c.b16 %v188, %v185
    %v213 = vpack.c.b16 %v189, %v186
    %v239 = vlaneseq
    %v240 = vshrl.u32 %v239, 7
    %v241 = vsub.s32 0, %v240
    %v242 = vrot.slane %v109, %v241
    %v243 = vlaneseq
    %v244 = vshrl.u32 %v243, 7
    %v245 = vsub.s32 1, %v244
    %v246 = vrot.slane %v109, %v245
    %v247 = vlaneseq
    %v248 = vshrl.u32 %v247, 7
    %v249 = vsub.s32 2, %v248
    %v250 = vrot.slane %v109, %v249
    %254 = vmatprep.subr.bf16.mxu0 %v191
    %255 = vmatpush1.bf16.msra.mxu0 %v190
    %256 = vmatprep.subr.bf16.mxu0 %v194
    %257 = vmatpush1.bf16.msra.mxu0 %v193
    %258 = vmatprep.subr.bf16.mxu0 %v197
    %259 = vmatpush1.bf16.msra.mxu0 %v196
    %260 = vmatprep.subr.bf16.mxu0 %v200
    %261 = vmatpush1.bf16.msra.mxu0 %v199
    %262 = vmatprep.subr.bf16.mxu0 %v203
    %263 = vmatpush1.bf16.msra.mxu0 %v202
    %264 = vmatprep.subr.bf16.mxu0 %v206
    %265 = vmatpush1.bf16.msra.mxu0 %v205
    %266 = vmatprep.subr.bf16.mxu0 %v209
    %267 = vmatpush1.bf16.msra.mxu0 %v208
    %268 = vmatprep.subr.bf16.mxu0 %v212
    %269 = vmatpush1.bf16.msra.mxu0 %v211
    %270 = vmatprep.subr.bf16.mxu0 0
    %271 = vmatpush1.bf16.msra.mxu0 0
    %272 = vmatprep.subr.bf16.mxu0 0
    %273 = vmatpush1.bf16.msra.mxu0 0
    %274 = vmatprep.subr.bf16.mxu0 0
    %275 = vmatpush1.bf16.msra.mxu0 0
    %276 = vmatprep.subr.bf16.mxu0 0
    %277 = vmatpush1.bf16.msra.mxu0 0
    %278 = vmatprep.subr.bf16.mxu0 0
    %279 = vmatpush1.bf16.msra.mxu0 0
    %280 = vmatprep.subr.bf16.mxu0 0
    %281 = vmatpush1.bf16.msra.mxu0 0
    %282 = vmatprep.subr.bf16.mxu0 0
    %283 = vmatpush1.bf16.msra.mxu0 0
    %284 = vmatprep.subr.bf16.mxu0 0
    %285 = vmatpush1.bf16.msra.mxu0 0
    %286 = vmatprep.mubr.bf16.mxu0 0
    %287 = vmatmul.mubr.bf16.gmra.mrb[0].mxu0 %v75
    %v288 = vpop.f32.mrb[0].mxu0
    %v289 = vadd.f32 %v242, %v288
    %v290 = vpop.f32.mrb[0].mxu0
    %v291 = vadd.f32 %v246, %v290
    %v292 = vpop.f32.mrb[0].mxu0
    %v293 = vpop.f32.mrb[0].mxu0
    %294 = vdwg.mxu0
    %295 = vmatprep.subr.bf16.mxu0 0
    %296 = vmatpush1.bf16.msra.mxu0 %v192
    %297 = vmatprep.subr.bf16.mxu0 0
    %298 = vmatpush1.bf16.msra.mxu0 %v195
    %299 = vmatprep.subr.bf16.mxu0 0
    %300 = vmatpush1.bf16.msra.mxu0 %v198
    %301 = vmatprep.subr.bf16.mxu0 0
    %302 = vmatpush1.bf16.msra.mxu0 %v201
    %303 = vmatprep.subr.bf16.mxu0 0
    %304 = vmatpush1.bf16.msra.mxu0 %v204
    %305 = vmatprep.subr.bf16.mxu0 0
    %306 = vmatpush1.bf16.msra.mxu0 %v207
    %307 = vmatprep.subr.bf16.mxu0 0
    %308 = vmatpush1.bf16.msra.mxu0 %v210
    %309 = vmatprep.subr.bf16.mxu0 0
    %310 = vmatpush1.bf16.msra.mxu0 %v213
    %311 = vmatprep.subr.bf16.mxu0 0
    %312 = vmatpush1.bf16.msra.mxu0 0
    %313 = vmatprep.subr.bf16.mxu0 0
    %314 = vmatpush1.bf16.msra.mxu0 0
    %315 = vmatprep.subr.bf16.mxu0 0
    %316 = vmatpush1.bf16.msra.mxu0 0
    %317 = vmatprep.subr.bf16.mxu0 0
    %318 = vmatpush1.bf16.msra.mxu0 0
    %319 = vmatprep.subr.bf16.mxu0 0
    %320 = vmatpush1.bf16.msra.mxu0 0
    %321 = vmatprep.subr.bf16.mxu0 0
    %322 = vmatpush1.bf16.msra.mxu0 0
    %323 = vmatprep.subr.bf16.mxu0 0
    %324 = vmatpush1.bf16.msra.mxu0 0
    %325 = vmatprep.subr.bf16.mxu0 0
    %326 = vmatpush1.bf16.msra.mxu0 0
    %327 = vmatprep.mubr.bf16.mxu0 0
    %328 = vmatmul.mubr.bf16.gmra.mrb[0].mxu0 %v75
    %v329 = vpop.f32.mrb[0].mxu0
    %v330 = vadd.f32 %v250, %v329
    %v331 = vpop.f32.mrb[0].mxu0
    %v332 = vpop.f32.mrb[0].mxu0
    %v333 = vpop.f32.mrb[0].mxu0
    %334 = vdwg.mxu0
    %v335 = vpack.c.bf16 %v76, %v76
    %v336 = vld [vmem:[#allocation8] sm:$0xff]
    %v337 = vld [vmem:[#allocation8 + $0x8] sm:$0xf]
    %v338 = vld [vmem:[#allocation8 + $0xc] sm:$0xff]
    %v339 = vld [vmem:[#allocation8 + $0x14] sm:$0xf]
    %v340 = vld [vmem:[#allocation8 + $0x18] sm:$0xff]
    %v341 = vld [vmem:[#allocation8 + $0x20] sm:$0xf]
    %v342 = vld [vmem:[#allocation8 + $0x24] sm:$0xff]
    %v343 = vld [vmem:[#allocation8 + $0x2c] sm:$0xf]
    %v344 = vld [vmem:[#allocation8 + $0x30] sm:$0xff]
    %v345 = vld [vmem:[#allocation8 + $0x38] sm:$0xf]
    %v346 = vld [vmem:[#allocation8 + $0x3c] sm:$0xff]
    %v347 = vld [vmem:[#allocation8 + $0x44] sm:$0xf]
    %v348 = vld [vmem:[#allocation8 + $0x48] sm:$0xff]
    %v349 = vld [vmem:[#allocation8 + $0x50] sm:$0xf]
    %v350 = vld [vmem:[#allocation8 + $0x54] sm:$0xff]
    %v351 = vld [vmem:[#allocation8 + $0x5c] sm:$0xf]
    %v352 = vld [vmem:[#allocation8 + $0x60] sm:$0xff]
    %v353 = vld [vmem:[#allocation8 + $0x68] sm:$0xf]
    %v354 = vld [vmem:[#allocation8 + $0x6c] sm:$0xff]
    %v355 = vld [vmem:[#allocation8 + $0x74] sm:$0xf]
    %v356 = vld [vmem:[#allocation8 + $0x78] sm:$0xff]
    %v357 = vld [vmem:[#allocation8 + $0x80] sm:$0xf]
    %v358 = vld [vmem:[#allocation8 + $0x84] sm:$0xff]
    %v359 = vld [vmem:[#allocation8 + $0x8c] sm:$0xf]
    %v360 = vld [vmem:[#allocation8 + $0x90] sm:$0xff]
    %v361 = vld [vmem:[#allocation8 + $0x98] sm:$0xf]
    %v362 = vld [vmem:[#allocation8 + $0x9c] sm:$0xff]
    %v363 = vld [vmem:[#allocation8 + $0xa4] sm:$0xf]
    %v364 = vld [vmem:[#allocation8 + $0xa8] sm:$0xff]
    %v365 = vld [vmem:[#allocation8 + $0xb0] sm:$0xf]
    %v366 = vld [vmem:[#allocation8 + $0xb4] sm:$0xff]
    %v367 = vld [vmem:[#allocation8 + $0xbc] sm:$0xf]
    %v368 = vld [vmem:[%s6] sm:$0x7]
    %v401 = vunpack.c.l.b16 %v336
    %v402 = vunpack.c.h.b16 %v336
    %v403 = vunpack.c.l.b16 %v337
    %v404 = vunpack.c.l.b16 %v338
    %v405 = vunpack.c.h.b16 %v338
    %v406 = vunpack.c.l.b16 %v339
    %v407 = vunpack.c.l.b16 %v340
    %v408 = vunpack.c.h.b16 %v340
    %v409 = vunpack.c.l.b16 %v341
    %v410 = vunpack.c.l.b16 %v342
    %v411 = vunpack.c.h.b16 %v342
    %v412 = vunpack.c.l.b16 %v343
    %v413 = vunpack.c.l.b16 %v344
    %v414 = vunpack.c.h.b16 %v344
    %v415 = vunpack.c.l.b16 %v345
    %v416 = vunpack.c.l.b16 %v346
    %v417 = vunpack.c.h.b16 %v346
    %v418 = vunpack.c.l.b16 %v347
    %v419 = vunpack.c.l.b16 %v348
    %v420 = vunpack.c.h.b16 %v348
    %v421 = vunpack.c.l.b16 %v349
    %v422 = vunpack.c.l.b16 %v350
    %v423 = vunpack.c.h.b16 %v350
    %v424 = vunpack.c.l.b16 %v351
    %v425 = vunpack.c.l.b16 %v352
    %v426 = vunpack.c.h.b16 %v352
    %v427 = vunpack.c.l.b16 %v353
    %v428 = vunpack.c.l.b16 %v354
    %v429 = vunpack.c.h.b16 %v354
    %v430 = vunpack.c.l.b16 %v355
    %v431 = vunpack.c.l.b16 %v356
    %v432 = vunpack.c.h.b16 %v356
    %v433 = vunpack.c.l.b16 %v357
    %v434 = vunpack.c.l.b16 %v358
    %v435 = vunpack.c.h.b16 %v358
    %v436 = vunpack.c.l.b16 %v359
    %v437 = vunpack.c.l.b16 %v360
    %v438 = vunpack.c.h.b16 %v360
    %v439 = vunpack.c.l.b16 %v361
    %v440 = vunpack.c.l.b16 %v362
    %v441 = vunpack.c.h.b16 %v362
    %v442 = vunpack.c.l.b16 %v363
    %v443 = vunpack.c.l.b16 %v364
    %v444 = vunpack.c.h.b16 %v364
    %v445 = vunpack.c.l.b16 %v365
    %v446 = vunpack.c.l.b16 %v366
    %v447 = vunpack.c.h.b16 %v366
    %v448 = vunpack.c.l.b16 %v367
    %v449 = vpack.c.b16 %v404, %v401
    %v450 = vpack.c.b16 %v405, %v402
    %v451 = vpack.c.b16 %v406, %v403
    %v452 = vpack.c.b16 %v410, %v407
    %v453 = vpack.c.b16 %v411, %v408
    %v454 = vpack.c.b16 %v412, %v409
    %v455 = vpack.c.b16 %v416, %v413
    %v456 = vpack.c.b16 %v417, %v414
    %v457 = vpack.c.b16 %v418, %v415
    %v458 = vpack.c.b16 %v422, %v419
    %v459 = vpack.c.b16 %v423, %v420
    %v460 = vpack.c.b16 %v424, %v421
    %v461 = vpack.c.b16 %v428, %v425
    %v462 = vpack.c.b16 %v429, %v426
    %v463 = vpack.c.b16 %v430, %v427
    %v464 = vpack.c.b16 %v434, %v431
    %v465 = vpack.c.b16 %v435, %v432
    %v466 = vpack.c.b16 %v436, %v433
    %v467 = vpack.c.b16 %v440, %v437
    %v468 = vpack.c.b16 %v441, %v438
    %v469 = vpack.c.b16 %v442, %v439
    %v470 = vpack.c.b16 %v446, %v443
    %v471 = vpack.c.b16 %v447, %v444
    %v472 = vpack.c.b16 %v448, %v445
    %v498 = vlaneseq
    %v499 = vshrl.u32 %v498, 7
    %v500 = vsub.s32 0, %v499
    %v501 = vrot.slane %v368, %v500
    %v502 = vlaneseq
    %v503 = vshrl.u32 %v502, 7
    %v504 = vsub.s32 1, %v503
    %v505 = vrot.slane %v368, %v504
    %v506 = vlaneseq
    %v507 = vshrl.u32 %v506, 7
    %v508 = vsub.s32 2, %v507
    %v509 = vrot.slane %v368, %v508
    %513 = vmatprep.subr.bf16.mxu0 %v450
    %514 = vmatpush1.bf16.msra.mxu0 %v449
    %515 = vmatprep.subr.bf16.mxu0 %v453
    %516 = vmatpush1.bf16.msra.mxu0 %v452
    %517 = vmatprep.subr.bf16.mxu0 %v456
    %518 = vmatpush1.bf16.msra.mxu0 %v455
    %519 = vmatprep.subr.bf16.mxu0 %v459
    %520 = vmatpush1.bf16.msra.mxu0 %v458
    %521 = vmatprep.subr.bf16.mxu0 %v462
    %522 = vmatpush1.bf16.msra.mxu0 %v461
    %523 = vmatprep.subr.bf16.mxu0 %v465
    %524 = vmatpush1.bf16.msra.mxu0 %v464
    %525 = vmatprep.subr.bf16.mxu0 %v468
    %526 = vmatpush1.bf16.msra.mxu0 %v467
    %527 = vmatprep.subr.bf16.mxu0 %v471
    %528 = vmatpush1.bf16.msra.mxu0 %v470
    %529 = vmatprep.subr.bf16.mxu0 0
    %530 = vmatpush1.bf16.msra.mxu0 0
    %531 = vmatprep.subr.bf16.mxu0 0
    %532 = vmatpush1.bf16.msra.mxu0 0
    %533 = vmatprep.subr.bf16.mxu0 0
    %534 = vmatpush1.bf16.msra.mxu0 0
    %535 = vmatprep.subr.bf16.mxu0 0
    %536 = vmatpush1.bf16.msra.mxu0 0
    %537 = vmatprep.subr.bf16.mxu0 0
    %538 = vmatpush1.bf16.msra.mxu0 0
    %539 = vmatprep.subr.bf16.mxu0 0
    %540 = vmatpush1.bf16.msra.mxu0 0
    %541 = vmatprep.subr.bf16.mxu0 0
    %542 = vmatpush1.bf16.msra.mxu0 0
    %543 = vmatprep.subr.bf16.mxu0 0
    %544 = vmatpush1.bf16.msra.mxu0 0
    %545 = vmatprep.mubr.bf16.mxu0 0
    %546 = vmatmul.mubr.bf16.gmra.mrb[0].mxu0 %v335
    %v547 = vpop.f32.mrb[0].mxu0
    %v548 = vadd.f32 %v501, %v547
    %v549 = vpop.f32.mrb[0].mxu0
    %v550 = vadd.f32 %v505, %v549
    %v551 = vpop.f32.mrb[0].mxu0
    %v552 = vpop.f32.mrb[0].mxu0
    %553 = vdwg.mxu0
    %554 = vmatprep.subr.bf16.mxu0 0
    %555 = vmatpush1.bf16.msra.mxu0 %v451
    %556 = vmatprep.subr.bf16.mxu0 0
    %557 = vmatpush1.bf16.msra.mxu0 %v454
    %558 = vmatprep.subr.bf16.mxu0 0
    %559 = vmatpush1.bf16.msra.mxu0 %v457
    %560 = vmatprep.subr.bf16.mxu0 0
    %561 = vmatpush1.bf16.msra.mxu0 %v460
    %562 = vmatprep.subr.bf16.mxu0 0
    %563 = vmatpush1.bf16.msra.mxu0 %v463
    %564 = vmatprep.subr.bf16.mxu0 0
    %565 = vmatpush1.bf16.msra.mxu0 %v466
    %566 = vmatprep.subr.bf16.mxu0 0
    %567 = vmatpush1.bf16.msra.mxu0 %v469
    %568 = vmatprep.subr.bf16.mxu0 0
    %569 = vmatpush1.bf16.msra.mxu0 %v472
    %570 = vmatprep.subr.bf16.mxu0 0
    %571 = vmatpush1.bf16.msra.mxu0 0
    %572 = vmatprep.subr.bf16.mxu0 0
    %573 = vmatpush1.bf16.msra.mxu0 0
    %574 = vmatprep.subr.bf16.mxu0 0
    %575 = vmatpush1.bf16.msra.mxu0 0
    %576 = vmatprep.subr.bf16.mxu0 0
    %577 = vmatpush1.bf16.msra.mxu0 0
    %578 = vmatprep.subr.bf16.mxu0 0
    %579 = vmatpush1.bf16.msra.mxu0 0
    %580 = vmatprep.subr.bf16.mxu0 0
    %581 = vmatpush1.bf16.msra.mxu0 0
    %582 = vmatprep.subr.bf16.mxu0 0
    %583 = vmatpush1.bf16.msra.mxu0 0
    %584 = vmatprep.subr.bf16.mxu0 0
    %585 = vmatpush1.bf16.msra.mxu0 0
    %586 = vmatprep.mubr.bf16.mxu0 0
    %587 = vmatmul.mubr.bf16.gmra.mrb[0].mxu0 %v335
    %v588 = vpop.f32.mrb[0].mxu0
    %v589 = vadd.f32 %v509, %v588
    %v590 = vpop.f32.mrb[0].mxu0
    %v591 = vpop.f32.mrb[0].mxu0
    %v592 = vpop.f32.mrb[0].mxu0
    %593 = vdwg.mxu0
    %v594 = vadd.f32 %v289, %v548
    %v595 = vxor.u32 %v594, 2147483648
    %v596 = vmul.f32 %v595, 1.442695
    %v597 = vpow.pop %v596
    %v598 = vadd.f32 %v597, 1.0
    %v599 = vrcp.pop %v598
    %v600 = vmul.f32 1.0, %v599
    %v601 = vadd.f32 %v291, %v550
    %v602 = vxor.u32 %v601, 2147483648
    %v603 = vmul.f32 %v602, 1.442695
    %v604 = vpow.pop %v603
    %v605 = vadd.f32 %v604, 1.0
    %v606 = vrcp.pop %v605
    %v607 = vmul.f32 1.0, %v606
    %v608 = vmul.f32 %v600, %v589
    %v609 = vadd.f32 %v330, %v608
    %v610 = vtanh.pop %v609
    %v611 = vsub.f32 1.0, %v607
    %v612 = vmul.f32 %v611, %v610
    %v613 = vmul.f32 %v607, %v76
    %v614 = vadd.f32 %v612, %v613
    %615 = vst [vmem:[#allocation2] sm:$0x1] %v614
    %616 = vst [vmem:[#allocation10] sm:$0x1] %v614
    // Predicated region
    $region38: #{gru_encode.1} parent=1 // pred_check
      _
    $region39: #{gru_encode.1} parent=1 // pred_check_branch
      %618 = sbr.rel (0) target = $region41
    $region40: #{gru_encode.1} parent=1 // pred_region
      %s620 = ssub.s32 16, 16
      %621 = vsyncadd [#allocation7], %s620
      %s623 = sshll.u32 [#allocation10], 4
      %s624 = int_to_ptr.vmem [resolvable:$true] %s623
      %626 = dma.vmem_to_hbm [thread:$0]  %s624, 16, %s7, [#allocation7]
    $region41: #{gru_encode.1} parent=1 // pred_fallthru
      _
    // Predicated region
    $region42: #{gru_encode.1} parent=1 // pred_check
      _
    $region43: #{gru_encode.1} parent=1 // pred_check_branch
      %628 = sbr.rel (0) target = $region45
    $region44: #{gru_encode.1} parent=1 // pred_region
      %629 = dma.done [#allocation7], 16
    $region45: #{gru_encode.1} parent=1 // pred_fallthru
      _
    %630 = vsyncpa [#allocation6], 1
    %631 = vsyncpa [#allocation9], 1
    %632 = vsyncpa [#allocation7], 1

</llo_original>
